<compile_context>
chip_gen: v5e
topology: v5e:2x2
jax: 0.10.0
libtpu: 0.0.40
codegen_flags: <defaults>
</compile_context>

<pallas_src>
import jax
import jax.numpy as jnp
from jax.experimental import pallas as pl
from jax.experimental.pallas import tpu as pltpu

LANE = 128


def _multiply_kernel(*refs):
    # refs = (in_ref_0, ..., in_ref_{n-1}, out_ref)
    in_refs = refs[:-1]
    out_ref = refs[-1]
    acc = in_refs[0][...]              # seed from first input (result = 1 * t0)
    for r in in_refs[1:]:              # result *= t
        acc = acc * r[...]
    out_ref[...] = acc


def _round_down(x, m):
    return (x // m) * m


def _round_up(x, m):
    return -(-x // m) * m


def _sublane_pack(itemsize):
    # native sublane packing per vreg: 8 rows (32-bit), 16 (16-bit), 32 (8-bit)
    return {4: 8, 2: 16, 1: 32}.get(itemsize, 8)


def _chip_info():
    """Returns (is_multi_tc, per_tc_vmem_bytes) with conservative fallbacks."""
    kind = ""
    try:
        kind = jax.devices()[0].device_kind.lower()
    except Exception:  # pragma: no cover
        pass
    is_multi_tc = "7" in kind  # v7x: 2 TensorCores per chip, 64 MiB VMEM each
    per_tc_cap = (64 << 20) if is_multi_tc else (128 << 20)
    per_tc_vmem = None
    try:
        cap = int(pltpu.get_tpu_info().vmem_capacity_bytes)
        # If the query reports chip-level capacity on a 2-TC part, halve it.
        per_tc_vmem = cap // 2 if (is_multi_tc and cap > per_tc_cap) else cap
    except Exception:  # pragma: no cover
        per_tc_vmem = None
    if per_tc_vmem is None or per_tc_vmem <= 0:
        per_tc_vmem = per_tc_cap
    return is_multi_tc, min(per_tc_vmem, per_tc_cap)


def _pallas_product_2d(slabs, rows, dtype, n):
    """Elementwise product of n same-shape (rows, LANE) slabs via Pallas."""
    itemsize = jnp.dtype(dtype).itemsize
    sub = _sublane_pack(itemsize)
    row_bytes = LANE * itemsize

    is_multi_tc, per_tc_vmem = _chip_info()
    budget = (per_tc_vmem * 3) // 4          # headroom for Mosaic internal scratch

    # Deeper input pipelining only on big-VMEM single-TC parts with many inputs.
    use_deep = (not is_multi_tc) and n >= 8
    in_bufs = 3 if use_deep else 2
    denom = n * in_bufs + 2                  # inputs + double-buffered output

    max_tile_rows = max(sub, (budget // denom) // row_bytes)
    target_tile_rows = max(sub, (4 << 20) // row_bytes)    # ~4 MiB per buffer
    tile_rows = min(target_tile_rows, max_tile_rows)

    # Give a 2-TC chip >=8 grid steps (>=4 per core) on large slabs.
    if is_multi_tc and rows * row_bytes >= (8 << 20):
        eighth = max(sub, _round_up(pl.cdiv(rows, 8), sub))
        tile_rows = min(tile_rows, eighth)

    if tile_rows >= rows:
        tile_rows = rows                     # single full-extent block
        grid = (1,)
    else:
        tile_rows = max(sub, _round_down(tile_rows, sub))
        grid = (pl.cdiv(rows, tile_rows),)   # ragged row tail handled by Pallas

    block = (tile_rows, LANE)
    out_spec = pl.BlockSpec(block, lambda i: (i, 0))
    if use_deep and grid[0] > 3:
        in_spec = pl.BlockSpec(block, lambda i: (i, 0), pipeline_mode=pl.Buffered(3))
    else:
        in_spec = out_spec
        in_bufs = 2

    tile_bytes = tile_rows * row_bytes
    needed = (n * in_bufs + 2) * tile_bytes
    vmem_limit = int(min(budget, needed + (4 << 20)))
    vmem_limit = max(vmem_limit, 16 << 20)

    return pl.pallas_call(
        _multiply_kernel,
        out_shape=jax.ShapeDtypeStruct((rows, LANE), dtype),
        grid=grid,
        in_specs=[in_spec] * n,
        out_specs=out_spec,
        compiler_params=pltpu.CompilerParams(
            dimension_semantics=("parallel",),
            vmem_limit_bytes=vmem_limit,
        ),
    )(*slabs)


def multiply(tensors):
    """Elementwise product of a list of same-shaped arrays (Pallas TPU kernel)."""
    assert len(tensors) >= 1
    shape = tensors[0].shape
    dtype = tensors[0].dtype
    for t in tensors:
        # TODO(synk): broadcasting / mixed-dtype inputs are not supported.
        assert t.shape == shape and t.dtype == dtype

    n = len(tensors)
    if n == 1:
        return tensors[0]                    # result = ones(shape) * t0

    total = 1
    for d in shape:
        total *= d

    # Split very wide input lists so per-buffer tiles stay above ~256 KiB.
    _, per_tc_vmem = _chip_info()
    budget = (per_tc_vmem * 3) // 4
    max_n_per_pass = max(2, budget // (2 * (256 << 10)) - 1)
    if n > max_n_per_pass:
        half = n // 2
        return multiply([multiply(tensors[:half]), multiply(tensors[half:])])

    main = _round_down(total, LANE)          # 128-aligned prefix goes through Pallas
    if main == 0:
        out = tensors[0]                     # tiny input: XLA fusion is optimal
        for t in tensors[1:]:
            out = out * t
        return out

    rows = main // LANE
    flats = [t.reshape(-1) for t in tensors]
    if main == total:
        slabs = [f.reshape(rows, LANE) for f in flats]          # no copy
    else:
        slabs = [f[:main].reshape(rows, LANE) for f in flats]   # aligned prefix

    out2d = _pallas_product_2d(slabs, rows, dtype, n)

    if main == total:
        return out2d.reshape(shape)

    # <128-element ragged tail: plain XLA (tiny), no pad pass, no output slice pass.
    tail = flats[0][main:]
    for f in flats[1:]:
        tail = tail * f[main:]
    return jnp.concatenate([out2d.reshape(-1), tail]).reshape(shape)


if __name__ == "__main__":
    key = jax.random.PRNGKey(0)
    k1, k2, k3, k4, k5 = jax.random.split(key, 5)

    # NCHW inputs, small shapes consistent with the module
    shape = (2, 4, 16, 16)
    a = jax.random.normal(k1, shape, dtype=jnp.float32)
    b = jax.random.normal(k2, shape, dtype=jnp.float32)
    c = jax.random.normal(k3, shape, dtype=jnp.float32)

    out = multiply([a, b, c])
    out = jax.block_until_ready(out)
    ref = a * b * c
    assert out.shape == shape
    assert jnp.allclose(out, ref, atol=1e-6, rtol=1e-6)

    # Ragged shape (element count not a multiple of 128): prefix+tail path.
    rshape = (3, 7, 11)
    x = jax.random.normal(k4, rshape, dtype=jnp.float32)
    y = jax.random.normal(k5, rshape, dtype=jnp.float32)
    rout = jax.block_until_ready(multiply([x, y]))
    assert rout.shape == rshape
    assert jnp.allclose(rout, x * y, atol=1e-6, rtol=1e-6)

    # n == 1 short-circuit (result = ones * t0).
    assert jnp.allclose(multiply([a]), a)

    print("KERNEL_OK")
</pallas_src>

<mosaic_0001>
module attributes {stable_mosaic.version = 11 : i64} {
  func.func @_multiply_kernel(%arg0: i32, %arg1: memref<16x128xf32, #tpu.memory_space<vmem>>, %arg2: memref<16x128xf32, #tpu.memory_space<vmem>>, %arg3: memref<16x128xf32, #tpu.memory_space<vmem>>, %arg4: memref<16x128xf32, #tpu.memory_space<vmem>>) attributes {dimension_semantics = [#tpu.dimension_semantics<parallel>], iteration_bounds = array<i64: 1>, scalar_prefetch = 0 : i64, scratch_operands = 0 : i64, tpu.core_type = #tpu.core_type<tc>, window_params = [{transform_indices = @transform_0, window_bounds = array<i64: 16, 128>}, {transform_indices = @transform_1, window_bounds = array<i64: 16, 128>}, {transform_indices = @transform_2, window_bounds = array<i64: 16, 128>}, {transform_indices = @transform_3, window_bounds = array<i64: 16, 128>}]} {
    %c0 = arith.constant 0 : index
    %c0_0 = arith.constant 0 : index
    %0 = vector.load %arg1[%c0, %c0_0] : memref<16x128xf32, #tpu.memory_space<vmem>>, vector<16x128xf32>
    %c0_1 = arith.constant 0 : index
    %c0_2 = arith.constant 0 : index
    %1 = vector.load %arg2[%c0_1, %c0_2] : memref<16x128xf32, #tpu.memory_space<vmem>>, vector<16x128xf32>
    %2 = arith.mulf %0, %1 : vector<16x128xf32>
    %c0_3 = arith.constant 0 : index
    %c0_4 = arith.constant 0 : index
    %3 = vector.load %arg3[%c0_3, %c0_4] : memref<16x128xf32, #tpu.memory_space<vmem>>, vector<16x128xf32>
    %4 = arith.mulf %2, %3 : vector<16x128xf32>
    %c0_5 = arith.constant 0 : index
    %c0_6 = arith.constant 0 : index
    %5 = vector.load %arg4[%c0_5, %c0_6] : memref<16x128xf32, #tpu.memory_space<vmem>>, vector<16x128xf32>
    tpu.vector_store %arg4[%c0_5, %c0_6], %4 {strides = array<i32>} : memref<16x128xf32, #tpu.memory_space<vmem>>, vector<16x128xf32>,
    return
  }
  func.func @transform_0(%arg0: i32) -> (i32, i32) {
    %c0_i32 = arith.constant 0 : i32
    %c0_i32_0 = arith.constant 0 : i32
    return %arg0, %c0_i32 : i32, i32
  }
  func.func @transform_1(%arg0: i32) -> (i32, i32) {
    %c0_i32 = arith.constant 0 : i32
    %c0_i32_0 = arith.constant 0 : i32
    return %arg0, %c0_i32 : i32, i32
  }
  func.func @transform_2(%arg0: i32) -> (i32, i32) {
    %c0_i32 = arith.constant 0 : i32
    %c0_i32_0 = arith.constant 0 : i32
    return %arg0, %c0_i32 : i32, i32
  }
  func.func @transform_3(%arg0: i32) -> (i32, i32) {
    %c0_i32 = arith.constant 0 : i32
    %c0_i32_0 = arith.constant 0 : i32
    return %arg0, %c0_i32 : i32, i32
  }
}

</mosaic_0001>

<llo_original>
// kernel: tpu_custom_call.1
$region0: #{tpu_custom_call.1}
  #allocation0 [shape = 'u32[]', space=smem, size = 0x4, offset = 0x4, fixed_abs, tag = 'smem constant byte address 0x4 - core index']
  #allocation1 [shape = 'u32[72,128]{1,0:T(1,128)}', space=vmem, size = 0x9000, scoped, tag = 'internal scratch']
  %s0 = inlined_call_operand.hbm [shape: f32[16,128], index: 0, kind: input, shape index: {}]
  %s1 = inlined_call_operand.hbm [shape: f32[16,128], index: 1, kind: input, shape index: {}]
  %s2 = inlined_call_operand.hbm [shape: f32[16,128], index: 2, kind: input, shape index: {}]
  %s3 = inlined_call_operand.hbm [shape: f32[16,128], index: 3, kind: output, shape index: {}]
  %s4 = sld [smem:[#allocation0]]
  $region34: #{tpu_custom_call.1} parent=0
    _
  %s6 = ssub.s32 1, %s4
  %s7 = scalar_select 0, %s6, %s4
  $region1: #{tpu_custom_call.1} parent=0
    #allocation2 [shape = 'u8[8192]{0}', space=vmem, size = 0x2000, scoped, tag = 'input window, operand 0, single buffered']
    #allocation3 [shape = 's32[1]{0}', space=sflag, size = 0x4, scoped, tag = 'scoped memory for tpu_custom_call.1']
    #allocation4 [shape = 's32[1]{0}', space=sflag, size = 0x4, scoped, tag = 'scoped memory for tpu_custom_call.1']
    #allocation5 [shape = 'u8[8192]{0}', space=vmem, size = 0x2000, scoped, tag = 'input window, operand 1, single buffered']
    #allocation6 [shape = 's32[1]{0}', space=sflag, size = 0x4, scoped, tag = 'scoped memory for tpu_custom_call.1']
    #allocation7 [shape = 'u8[8192]{0}', space=vmem, size = 0x2000, scoped, tag = 'input window, operand 2, single buffered']
    #allocation8 [shape = 'u8[8192]{0}', space=vmem, size = 0x2000, scoped, tag = 'output window, operand 0, single buffered']
    %8 = vsyncpa [#allocation3], 0
    %9 = vsyncpa [#allocation6], 0
    %10 = vsyncpa [#allocation4], 0
    // Predicated region
    $region2: #{tpu_custom_call.1} parent=1 // pred_check
      _
    $region3: #{tpu_custom_call.1} parent=1 // pred_check_branch
      %12 = sbr.rel (0) target = $region5
    $region4: #{tpu_custom_call.1} parent=1 // pred_region
      %14 = vsyncadd [#allocation3], 0
      %s15 = sshll.u32 %s0, 4
      %s16 = int_to_ptr.hbm [resolvable:$true] %s15
      %s17 = sshll.u32 [#allocation2], 4
      %s18 = int_to_ptr.vmem [resolvable:$true] %s17
      %23 = dma.hbm_to_vmem [thread:$0]  %s16, 256, %s18, [#allocation3], 128, 128, 8
    $region5: #{tpu_custom_call.1} parent=1 // pred_fallthru
      _
    // Predicated region
    $region6: #{tpu_custom_call.1} parent=1 // pred_check
      _
    $region7: #{tpu_custom_call.1} parent=1 // pred_check_branch
      %25 = sbr.rel (0) target = $region9
    $region8: #{tpu_custom_call.1} parent=1 // pred_region
      %27 = vsyncadd [#allocation6], 0
      %s28 = sshll.u32 %s1, 4
      %s29 = int_to_ptr.hbm [resolvable:$true] %s28
      %s30 = sshll.u32 [#allocation5], 4
      %s31 = int_to_ptr.vmem [resolvable:$true] %s30
      %36 = dma.hbm_to_vmem [thread:$0]  %s29, 256, %s31, [#allocation6], 128, 128, 8
    $region9: #{tpu_custom_call.1} parent=1 // pred_fallthru
      _
    // Predicated region
    $region10: #{tpu_custom_call.1} parent=1 // pred_check
      _
    $region11: #{tpu_custom_call.1} parent=1 // pred_check_branch
      %38 = sbr.rel (0) target = $region13
    $region12: #{tpu_custom_call.1} parent=1 // pred_region
      %40 = vsyncadd [#allocation6], 0
      %s41 = sshll.u32 %s2, 4
      %s42 = int_to_ptr.hbm [resolvable:$true] %s41
      %s43 = sshll.u32 [#allocation7], 4
      %s44 = int_to_ptr.vmem [resolvable:$true] %s43
      %49 = dma.hbm_to_vmem [thread:$0]  %s42, 256, %s44, [#allocation6], 128, 128, 8
    $region13: #{tpu_custom_call.1} parent=1 // pred_fallthru
      _
    // Predicated region
    $region14: #{tpu_custom_call.1} parent=1 // pred_check
      _
    $region15: #{tpu_custom_call.1} parent=1 // pred_check_branch
      %51 = sbr.rel (0) target = $region17
    $region16: #{tpu_custom_call.1} parent=1 // pred_region
      %53 = dma.done [#allocation3], 256
    $region17: #{tpu_custom_call.1} parent=1 // pred_fallthru
      _
    // Predicated region
    $region18: #{tpu_custom_call.1} parent=1 // pred_check
      _
    $region19: #{tpu_custom_call.1} parent=1 // pred_check_branch
      %55 = sbr.rel (0) target = $region21
    $region20: #{tpu_custom_call.1} parent=1 // pred_region
      %57 = dma.done [#allocation6], 256
    $region21: #{tpu_custom_call.1} parent=1 // pred_fallthru
      _
    // Predicated region
    $region22: #{tpu_custom_call.1} parent=1 // pred_check
      _
    $region23: #{tpu_custom_call.1} parent=1 // pred_check_branch
      %59 = sbr.rel (0) target = $region25
    $region24: #{tpu_custom_call.1} parent=1 // pred_region
      %61 = dma.done [#allocation6], 256
    $region25: #{tpu_custom_call.1} parent=1 // pred_fallthru
      _
    %v62 = vld [vmem:[#allocation2] sm:$0xff]
    %v63 = vld [vmem:[#allocation2 + $0x8] sm:$0xff]
    %v64 = vld [vmem:[#allocation5] sm:$0xff]
    %v65 = vld [vmem:[#allocation5 + $0x8] sm:$0xff]
    %v66 = vmul.f32 %v62, %v64
    %v67 = vmul.f32 %v63, %v65
    %v68 = vld [vmem:[#allocation7] sm:$0xff]
    %v69 = vld [vmem:[#allocation7 + $0x8] sm:$0xff]
    %v70 = vmul.f32 %v66, %v68
    %v71 = vmul.f32 %v67, %v69
    %72 = vst [vmem:[#allocation8] sm:$0xff] %v70
    %73 = vst [vmem:[#allocation8 + $0x8] sm:$0xff] %v71
    // Predicated region
    $region26: #{tpu_custom_call.1} parent=1 // pred_check
      _
    $region27: #{tpu_custom_call.1} parent=1 // pred_check_branch
      %75 = sbr.rel (0) target = $region29
    $region28: #{tpu_custom_call.1} parent=1 // pred_region
      %77 = vsyncadd [#allocation4], 0
      %s78 = sshll.u32 [#allocation8], 4
      %s79 = int_to_ptr.vmem [resolvable:$true] %s78
      %s80 = sshll.u32 %s3, 4
      %s81 = int_to_ptr.hbm [resolvable:$true] %s80
      %86 = dma.vmem_to_hbm [thread:$0]  %s79, 256, %s81, [#allocation4], 128, 128, 8
    $region29: #{tpu_custom_call.1} parent=1 // pred_fallthru
      _
    // Predicated region
    $region30: #{tpu_custom_call.1} parent=1 // pred_check
      _
    $region31: #{tpu_custom_call.1} parent=1 // pred_check_branch
      %88 = sbr.rel (0) target = $region33
    $region32: #{tpu_custom_call.1} parent=1 // pred_region
      %90 = dma.done [#allocation4], 256
    $region33: #{tpu_custom_call.1} parent=1 // pred_fallthru
      _
    %91 = vsyncpa [#allocation3], 1
    %92 = vsyncpa [#allocation6], 1
    %93 = vsyncpa [#allocation4], 1

</llo_original>
